<compile_context>
chip_gen: v7x
topology: tpu7x:2x2x1
jax: 0.10.0
libtpu: 0.0.40
codegen_flags: <defaults>
</compile_context>

<pallas_src>
import functools

import numpy as np
import jax
import jax.numpy as jnp
from jax.experimental import pallas as pl
from jax.experimental.pallas import tpu as pltpu


_LANE = 128


def _round_up(x, m):
    return (x + m - 1) // m * m


def _pad2d(a, rows, cols):
    r, c = a.shape
    if r == rows and c == cols:
        return a
    return jnp.pad(a, ((0, rows - r), (0, cols - c)))


def _tpu_generation():
    try:
        kind = jax.devices()[0].device_kind.lower()
    except Exception:
        return 0
    for g in (7, 6, 5, 4):
        if ("v%d" % g) in kind:
            return g
    return 0


def _caps(gen):
    """(cap_m, cap_n, cap_k, cap_stream, vmem_limit_bytes) per TPU generation."""
    if gen >= 7:
        # 64 MiB physical VMEM/TC; 1024-class tiles use ~20 MiB incl. buffers.
        return 1024, 1024, 1024, 2048, 48 * 1024 * 1024
    if gen == 6:
        # 128 MiB VMEM, ~650 flop/B compute/HBM crossover -> 1024 tiles + tk=1024.
        return 1024, 1024, 1024, 2048, 64 * 1024 * 1024
    # v5e (and unknown): ~240 flop/B crossover, 16 MiB scoped default.
    # 512 tiles are already roughly compute-bound; raise the limit only modestly.
    return 512, 512, 512, 1024, 32 * 1024 * 1024


def _tiles_large(T, S, gen):
    cm, _, ck, _, _ = _caps(gen)
    tm = min(cm, _round_up(T, _LANE))
    tk = min(ck, _round_up(S, _LANE))
    return tm, tk


def _tn_large(B, gen):
    _, cn, _, _, _ = _caps(gen)
    return min(cn, _round_up(B, _LANE))


def _tiles_small(T, S, gen):
    # Small-batch path: acc/out tiles are tiny, so spend the idle VMEM on wide
    # streamed-weight tiles (pure HBM streaming regime).
    _, _, _, cs, _ = _caps(gen)
    tn = min(cs, _round_up(T, _LANE))
    tk = min(cs, _round_up(S, _LANE))
    return tn, tk


def _tm_small(B):
    return min(_LANE, _round_up(B, 16))   # 16: bf16 sublane-packing friendly


def _mm_kernel(a_ref, b_ref, o_ref, acc_ref):
    """out[i,j] += a[i,k] @ b[k,j], f32 MXU accumulation in VMEM scratch."""
    @pl.when(pl.program_id(2) == 0)
    def _():
        acc_ref[...] = jnp.zeros_like(acc_ref)

    acc_ref[...] += jnp.dot(a_ref[...], b_ref[...],
                            preferred_element_type=jnp.float32)

    @pl.when(pl.program_id(2) == pl.num_programs(2) - 1)
    def _():
        o_ref[...] = acc_ref[...].astype(o_ref.dtype)


def _tiled_matmul(a, b, tm, tn, tk, *, out_m, out_n, out_dtype, vmem_limit):
    """a:(M,K) @ b:(K,N) -> (out_m, out_n) in out_dtype, tiled + pipelined.

    Operands may already be padded to tile multiples (pre-padded weights);
    padding here is then a no-op (pure Python shape check).
    """
    Mp = _round_up(a.shape[0], tm)
    Kp = _round_up(max(a.shape[1], b.shape[0]), tk)
    Np = _round_up(b.shape[1], tn)
    a = _pad2d(a, Mp, Kp)
    b = _pad2d(b, Kp, Np)

    gm, gn, gk = Mp // tm, Np // tn, Kp // tk
    out_itemsize = np.dtype(out_dtype).itemsize
    cost = pl.CostEstimate(
        flops=2 * Mp * Np * Kp,
        transcendentals=0,
        # Account for re-streaming: A tile re-read per j block, B per i block.
        bytes_accessed=(Mp * Kp * a.dtype.itemsize * gn
                        + Kp * Np * b.dtype.itemsize * gm
                        + Mp * Np * out_itemsize))

    out = pl.pallas_call(
        _mm_kernel,
        out_shape=jax.ShapeDtypeStruct((Mp, Np), out_dtype),
        grid_spec=pltpu.PrefetchScalarGridSpec(
            num_scalar_prefetch=0,
            grid=(gm, gn, gk),
            in_specs=[pl.BlockSpec((tm, tk), lambda i, j, k: (i, k)),
                      pl.BlockSpec((tk, tn), lambda i, j, k: (k, j))],
            out_specs=pl.BlockSpec((tm, tn), lambda i, j, k: (i, j)),
            scratch_shapes=[pltpu.VMEM((tm, tn), jnp.float32)]),
        compiler_params=pltpu.CompilerParams(
            dimension_semantics=("parallel", "parallel", "arbitrary"),
            vmem_limit_bytes=vmem_limit),
        cost_estimate=cost,
    )(a, b)

    if out_m == Mp and out_n == Np:
        return out               # no padding -> skip the slice copy entirely
    return out[:out_m, :out_n]


@functools.partial(jax.jit, static_argnames=("T", "S", "gen", "out_dtype"))
def _forward_impl(w_big, wT_small, x, *, T, S, gen, out_dtype=jnp.float32):
    """matmul(w, x) with bf16 operands / f32 accumulation.

    w_big   : (Tp, Sp)  pre-cast, pre-padded weight (large-batch path)
    wT_small: (Sp2, Tp2) pre-cast, pre-padded, pre-transposed weight (B<128 path)
    x       : (S, B) or (S,)
    """
    squeeze_out = x.ndim == 1
    if squeeze_out:
        x = x[:, None]
    S_in, B = x.shape
    if S_in != S:
        raise ValueError("source dimension mismatch")

    xc = x.astype(w_big.dtype)
    vlim = _caps(gen)[4]

    if B < _LANE:
        # Small batch (incl. GEMV): out^T = x^T @ w_T so the lane dim of the
        # kernel's output is T (lane-dense stores); the streamed weight is
        # already in MXU-native (K, N) layout -> no per-tile transpose.
        tn, tk = _tiles_small(T, S, gen)
        tm = _tm_small(B)
        out_t = _tiled_matmul(xc.T, wT_small, tm, tn, tk,
                              out_m=B, out_n=T,
                              out_dtype=out_dtype, vmem_limit=vlim)
        out = out_t.T                                    # (T, B), tiny
    else:
        tm, tk = _tiles_large(T, S, gen)
        tn = _tn_large(B, gen)
        out = _tiled_matmul(w_big, xc, tm, tn, tk,
                            out_m=T, out_n=B,
                            out_dtype=out_dtype, vmem_limit=vlim)

    if squeeze_out:
        out = out[:, 0]
    return out


class Connection:
    """Minimal JAX/Pallas port of the PyTorch Connection module (m2m / o2o, cuba)."""

    def __init__(self, source_neurons, target_neurons, key, mode="m2m",
                 weight_initialization="gaussian", synapse="cuba",
                 compute_dtype=jnp.bfloat16, out_dtype=jnp.float32):
        self.mode = mode
        self.synapse = synapse
        self.compute_dtype = compute_dtype
        self.out_dtype = out_dtype
        self.w = None

        if mode == "m2m":
            shape = (target_neurons, source_neurons)
        elif mode == "o2o":
            if target_neurons != source_neurons:
                raise Exception
            shape = (target_neurons,)
        else:
            # TODO(synk): 'm2o' / 'o2m' are no-ops in the reference __init__ as well.
            shape = None

        if shape is not None:
            if weight_initialization == "gaussian":
                w = jax.random.normal(key, shape, dtype=jnp.float32)
            elif weight_initialization == "uniform":
                w = jax.random.uniform(key, shape, dtype=jnp.float32)
            elif isinstance(weight_initialization, float):
                w = jnp.full(shape, weight_initialization, dtype=jnp.float32)
            else:
                w = jnp.asarray(weight_initialization, dtype=jnp.float32)
            self.set_weights(w)

    # -- weight cache -------------------------------------------------------
    def set_weights(self, w):
        """(Re)build the cached pre-cast / pre-padded / pre-transposed copies.

        Call this after any weight update (e.g. an STDP step) so the forward
        pass never re-casts or re-pads the full weight matrix per call.
        """
        self.w = w
        w2d = w if w.ndim == 2 else w[None, :]
        T, S = w2d.shape
        gen = _tpu_generation()
        wc = w2d.astype(self.compute_dtype)

        tm_l, tk_l = _tiles_large(T, S, gen)
        self._w_big = _pad2d(wc, _round_up(T, tm_l), _round_up(S, tk_l))

        tn_s, tk_s = _tiles_small(T, S, gen)
        self._wT_small = _pad2d(wc.T, _round_up(S, tk_s), _round_up(T, tn_s))

        self._T, self._S, self._gen = T, S, gen

    # -- forward ------------------------------------------------------------
    def forward(self, x):
        if self.synapse == "cuba":
            out = _forward_impl(self._w_big, self._wT_small, x,
                                T=self._T, S=self._S, gen=self._gen,
                                out_dtype=self.out_dtype)
            if self.mode == "o2o":
                # torch.matmul(w_1d, x): w treated as a (1, S) row vector.
                return out[0]
            return out

    def forward_steps(self, x_steps):
        """Fused multi-timestep forward: (n_steps, S, B) -> (n_steps, T, B).

        Folds time into the batch (lane) dimension so w is streamed once per
        call instead of once per timestep.
        """
        n, S, B = x_steps.shape
        x_flat = jnp.transpose(x_steps, (1, 0, 2)).reshape(S, n * B)
        out = _forward_impl(self._w_big, self._wT_small, x_flat,
                            T=self._T, S=self._S, gen=self._gen,
                            out_dtype=self.out_dtype)
        T = out.shape[0]
        return jnp.transpose(out.reshape(T, n, B), (1, 0, 2))

    def update(self):
        # TODO(synk): STDP learning-rule update is a separate kernel; after any
        # weight update call set_weights(self.w) to refresh the cached copies.
        pass

    def reset_trace(self):
        pass


if __name__ == "__main__":
    key = jax.random.PRNGKey(0)
    k_w, k_x1, k_x2, k_x3 = jax.random.split(key, 4)

    source_neurons, target_neurons, batch = 64, 32, 16

    conn = Connection(source_neurons, target_neurons, k_w,
                      mode="m2m", weight_initialization="gaussian",
                      synapse="cuba")

    def ref_matmul(w, x):
        # Reference with the same bf16-operand / f32-accumulate contract.
        return jnp.matmul(w.astype(jnp.bfloat16).astype(jnp.float32),
                          x.astype(jnp.bfloat16).astype(jnp.float32))

    # 1) Small-batch (lane-dense, pre-transposed weight) path, spike input (S, B).
    x = (jax.random.uniform(k_x1, (source_neurons, batch)) > 0.5).astype(jnp.float32)
    out = jax.block_until_ready(conn.forward(x))
    assert out.shape == (target_neurons, batch)
    assert jnp.allclose(out, ref_matmul(conn.w, x), atol=1e-3, rtol=1e-3)

    # 2) 1-D x (GEMV) path.
    x1 = (jax.random.uniform(k_x2, (source_neurons,)) > 0.5).astype(jnp.float32)
    out1 = jax.block_until_ready(conn.forward(x1))
    assert out1.shape == (target_neurons,)
    assert jnp.allclose(out1, ref_matmul(conn.w, x1[:, None])[:, 0],
                        atol=1e-3, rtol=1e-3)

    # 3) Large-batch path (B >= 128): standard (M, N, K) tiling.
    xb = (jax.random.uniform(k_x3, (source_neurons, 256)) > 0.5).astype(jnp.float32)
    outb = jax.block_until_ready(conn.forward(xb))
    assert outb.shape == (target_neurons, 256)
    assert jnp.allclose(outb, ref_matmul(conn.w, xb), atol=1e-3, rtol=1e-3)

    # 4) Fused multi-timestep forward (w streamed once across steps).
    n_steps = 8
    xs = (jax.random.uniform(k_x1, (n_steps, source_neurons, batch)) > 0.5
          ).astype(jnp.float32)
    outs = jax.block_until_ready(conn.forward_steps(xs))
    assert outs.shape == (n_steps, target_neurons, batch)
    ref_steps = jnp.stack([ref_matmul(conn.w, xs[i]) for i in range(n_steps)])
    assert jnp.allclose(outs, ref_steps, atol=1e-3, rtol=1e-3)

    # 5) o2o mode: torch.matmul(w_1d, x) semantics.
    conn_o2o = Connection(source_neurons, source_neurons, k_w, mode="o2o",
                          weight_initialization="uniform", synapse="cuba")
    out_o2o = jax.block_until_ready(conn_o2o.forward(x))
    assert out_o2o.shape == (batch,)
    assert jnp.allclose(out_o2o, ref_matmul(conn_o2o.w[None, :], x)[0],
                        atol=1e-3, rtol=1e-3)

    print("KERNEL_OK")
</pallas_src>

<mosaic_0001>
module attributes {stable_mosaic.version = 11 : i64} {
  func.func @_mm_kernel(%arg0: i32, %arg1: i32, %arg2: i32, %arg3: memref<16x128xbf16, #tpu.memory_space<vmem>>, %arg4: memref<128x128xbf16, #tpu.memory_space<vmem>>, %arg5: memref<16x128xf32, #tpu.memory_space<vmem>>, %arg6: memref<16x128xf32, #tpu.memory_space<vmem>>) attributes {dimension_semantics = [#tpu.dimension_semantics<parallel>, #tpu.dimension_semantics<parallel>, #tpu.dimension_semantics<arbitrary>], iteration_bounds = array<i64: 1, 1, 1>, scalar_prefetch = 0 : i64, scratch_operands = 1 : i64, tpu.core_type = #tpu.core_type<tc>, window_params = [{transform_indices = @transform_0, window_bounds = array<i64: 16, 128>}, {transform_indices = @transform_1, window_bounds = array<i64: 128, 128>}, {transform_indices = @transform_2, window_bounds = array<i64: 16, 128>}]} {
    %c0_i32 = arith.constant 0 : i32
    %0 = arith.cmpi eq, %arg2, %c0_i32 : i32
    %1 = arith.extui %0 : i1 to i32
    %c0_i32_0 = arith.constant 0 : i32
    %2 = arith.cmpi ne, %1, %c0_i32_0 : i32
    scf.if %2 {
      %cst_10 = arith.constant 0.000000e+00 : f32
      %12 = vector.broadcast %cst_10 : f32 to vector<16x128xf32>
      %c0_11 = arith.constant 0 : index
      %c0_12 = arith.constant 0 : index
      %13 = vector.load %arg6[%c0_11, %c0_12] : memref<16x128xf32, #tpu.memory_space<vmem>>, vector<16x128xf32>
      tpu.vector_store %arg6[%c0_11, %c0_12], %12 {strides = array<i32>} : memref<16x128xf32, #tpu.memory_space<vmem>>, vector<16x128xf32>,
    } else {
    }
    %c0 = arith.constant 0 : index
    %c0_1 = arith.constant 0 : index
    %3 = vector.load %arg6[%c0, %c0_1] : memref<16x128xf32, #tpu.memory_space<vmem>>, vector<16x128xf32>
    %c0_2 = arith.constant 0 : index
    %c0_3 = arith.constant 0 : index
    %4 = vector.load %arg3[%c0_2, %c0_3] : memref<16x128xbf16, #tpu.memory_space<vmem>>, vector<16x128xbf16>
    %c0_4 = arith.constant 0 : index
    %c0_5 = arith.constant 0 : index
    %5 = vector.load %arg4[%c0_4, %c0_5] : memref<128x128xbf16, #tpu.memory_space<vmem>>, vector<128x128xbf16>
    %cst = arith.constant dense<0.000000e+00> : vector<16x128xf32>
    %6 = tpu.matmul %4, %5, %cst {dimension_numbers = #tpu.dot_dimension_numbers<[1], [0], [0], [1], [0, 0, 1, 1], [], []>} : vector<16x128xbf16>, vector<128x128xbf16>, vector<16x128xf32> -> vector<16x128xf32>
    %7 = arith.addf %3, %6 : vector<16x128xf32>
    %c0_6 = arith.constant 0 : index
    %c0_7 = arith.constant 0 : index
    %8 = vector.load %arg6[%c0_6, %c0_7] : memref<16x128xf32, #tpu.memory_space<vmem>>, vector<16x128xf32>
    tpu.vector_store %arg6[%c0_6, %c0_7], %7 {strides = array<i32>} : memref<16x128xf32, #tpu.memory_space<vmem>>, vector<16x128xf32>,
    %c0_i32_8 = arith.constant 0 : i32
    %9 = arith.cmpi eq, %arg2, %c0_i32_8 : i32
    %10 = arith.extui %9 : i1 to i32
    %c0_i32_9 = arith.constant 0 : i32
    %11 = arith.cmpi ne, %10, %c0_i32_9 : i32
    scf.if %11 {
      %c0_10 = arith.constant 0 : index
      %c0_11 = arith.constant 0 : index
      %12 = vector.load %arg6[%c0_10, %c0_11] : memref<16x128xf32, #tpu.memory_space<vmem>>, vector<16x128xf32>
      %c0_12 = arith.constant 0 : index
      %c0_13 = arith.constant 0 : index
      %13 = vector.load %arg5[%c0_12, %c0_13] : memref<16x128xf32, #tpu.memory_space<vmem>>, vector<16x128xf32>
      tpu.vector_store %arg5[%c0_12, %c0_13], %12 {strides = array<i32>} : memref<16x128xf32, #tpu.memory_space<vmem>>, vector<16x128xf32>,
    } else {
    }
    return
  }
  func.func @transform_0(%arg0: i32, %arg1: i32, %arg2: i32) -> (i32, i32) {
    %c0_i32 = arith.constant 0 : i32
    return %arg0, %arg2 : i32, i32
  }
  func.func @transform_1(%arg0: i32, %arg1: i32, %arg2: i32) -> (i32, i32) {
    %c0_i32 = arith.constant 0 : i32
    return %arg2, %arg1 : i32, i32
  }
  func.func @transform_2(%arg0: i32, %arg1: i32, %arg2: i32) -> (i32, i32) {
    %c0_i32 = arith.constant 0 : i32
    return %arg0, %arg1 : i32, i32
  }
}

</mosaic_0001>

<llo_original>
// kernel: _forward_impl.1
$region0: #{_forward_impl.1}
  #allocation0 [shape = 'u32[]', space=smem, size = 0x4, offset = 0x4, fixed_abs, tag = 'smem constant byte address 0x4 - core index']
  #allocation1 [shape = 'u32[144,128]{1,0:T(1,128)}', space=vmem, size = 0x12000, scoped, tag = 'internal scratch']
  #allocation2 [shape = 'f32[16,128]{1,0:T(8,128)}', space=vmem, size = 0x2000, scoped, tag = 'scratch operand']
  %s0 = inlined_call_operand.vmem [shape: bf16[16,128], index: 0, kind: input, shape index: {}]
  %s1 = inlined_call_operand.hbm [shape: bf16[128,128], index: 1, kind: input, shape index: {}]
  %s2 = inlined_call_operand.vmem [shape: f32[16,128], index: 2, kind: output, shape index: {}]
  %s3 = sld [smem:[#allocation0]]
  $region30: #{_forward_impl.1} parent=0
    _
  %s5 = ssub.s32 1, %s3
  %s6 = scalar_select 0, %s5, %s3
  $region1: #{_forward_impl.1} parent=0
    #allocation3 [shape = 'u8[32768]{0}', space=vmem, size = 0x8000, scoped, tag = 'input window, operand 1, single buffered']
    #allocation4 [shape = 's32[1]{0}', space=sflag, size = 0x4, scoped, tag = 'scoped memory for _forward_impl.1']
    %7 = vsyncpa [#allocation4], 0
    // Predicated region
    $region2: #{_forward_impl.1} parent=1 // pred_check
      _
    $region3: #{_forward_impl.1} parent=1 // pred_check_branch
      %9 = sbr.rel (0) target = $region5
    $region4: #{_forward_impl.1} parent=1 // pred_region
      _
    $region5: #{_forward_impl.1} parent=1 // pred_fallthru
      _
    // Predicated region
    $region6: #{_forward_impl.1} parent=1 // pred_check
      _
    $region7: #{_forward_impl.1} parent=1 // pred_check_branch
      %11 = sbr.rel (0) target = $region9
    $region8: #{_forward_impl.1} parent=1 // pred_region
      %s13 = ssub.s32 1024, 1024
      %14 = vsyncadd [#allocation4], %s13
      %s15 = sshll.u32 [#allocation3], 4
      %s16 = int_to_ptr.vmem [resolvable:$true] %s15
      %21 = dma.hbm_to_vmem [thread:$0]  %s1, 1024, %s16, [#allocation4], 64, 64, 4
    $region9: #{_forward_impl.1} parent=1 // pred_fallthru
      _
    // Predicated region
    $region10: #{_forward_impl.1} parent=1 // pred_check
      _
    $region11: #{_forward_impl.1} parent=1 // pred_check_branch
      %23 = sbr.rel (0) target = $region13
    $region12: #{_forward_impl.1} parent=1 // pred_region
      %24 = dma.done [#allocation4], 1024
    $region13: #{_forward_impl.1} parent=1 // pred_fallthru
      _
    %p26 = scmp.eq.s32.totalorder 0, 0
    // Predicated region
    $region14: #{_forward_impl.1} parent=1 // pred_check
      %p27 = pneg %p26
    $region15: #{_forward_impl.1} parent=1 // pred_check_branch
      %29 = sbr.rel (%p27) target = $region17
    $region16: #{_forward_impl.1} parent=1 // pred_region
      %30 = vst [vmem:[#allocation2] sm:$0xff] 0.0
      %31 = vst [vmem:[#allocation2 + $0x8] sm:$0xff] 0.0
    $region17: #{_forward_impl.1} parent=1 // pred_fallthru
      _
    %v32 = vld [vmem:[#allocation2] sm:$0xff]
    %v33 = vld [vmem:[#allocation2 + $0x8] sm:$0xff]
    %v34 = vld [vmem:[%s0] sm:$0xf]
    %v35 = vld [vmem:[%s0 + $0x4] sm:$0xf]
    %v36 = vld [vmem:[#allocation3] sm:$0xf]
    %v37 = vld [vmem:[#allocation3 + $0x4] sm:$0xf]
    %v38 = vld [vmem:[#allocation3 + $0x8] sm:$0xf]
    %v39 = vld [vmem:[#allocation3 + $0xc] sm:$0xf]
    %v40 = vld [vmem:[#allocation3 + $0x10] sm:$0xf]
    %v41 = vld [vmem:[#allocation3 + $0x14] sm:$0xf]
    %v42 = vld [vmem:[#allocation3 + $0x18] sm:$0xf]
    %v43 = vld [vmem:[#allocation3 + $0x1c] sm:$0xf]
    %v44 = vld [vmem:[#allocation3 + $0x20] sm:$0xf]
    %v45 = vld [vmem:[#allocation3 + $0x24] sm:$0xf]
    %v46 = vld [vmem:[#allocation3 + $0x28] sm:$0xf]
    %v47 = vld [vmem:[#allocation3 + $0x2c] sm:$0xf]
    %v48 = vld [vmem:[#allocation3 + $0x30] sm:$0xf]
    %v49 = vld [vmem:[#allocation3 + $0x34] sm:$0xf]
    %v50 = vld [vmem:[#allocation3 + $0x38] sm:$0xf]
    %v51 = vld [vmem:[#allocation3 + $0x3c] sm:$0xf]
    %v54 = vunpack.c.l.b16 %v34
    %v55 = vunpack.c.l.b16 %v35
    %v56 = vpack.c.b16 %v55, %v54
    %v74 = vunpack.c.l.b16 %v36
    %v75 = vunpack.c.l.b16 %v37
    %v76 = vunpack.c.l.b16 %v38
    %v77 = vunpack.c.l.b16 %v39
    %v78 = vunpack.c.l.b16 %v40
    %v79 = vunpack.c.l.b16 %v41
    %v80 = vunpack.c.l.b16 %v42
    %v81 = vunpack.c.l.b16 %v43
    %v82 = vunpack.c.l.b16 %v44
    %v83 = vunpack.c.l.b16 %v45
    %v84 = vunpack.c.l.b16 %v46
    %v85 = vunpack.c.l.b16 %v47
    %v86 = vunpack.c.l.b16 %v48
    %v87 = vunpack.c.l.b16 %v49
    %v88 = vunpack.c.l.b16 %v50
    %v89 = vunpack.c.l.b16 %v51
    %v90 = vpack.c.b16 %v75, %v74
    %v91 = vpack.c.b16 %v77, %v76
    %v92 = vpack.c.b16 %v79, %v78
    %v93 = vpack.c.b16 %v81, %v80
    %v94 = vpack.c.b16 %v83, %v82
    %v95 = vpack.c.b16 %v85, %v84
    %v96 = vpack.c.b16 %v87, %v86
    %v97 = vpack.c.b16 %v89, %v88
    %106 = vmatprep.subr.bf16.mxu0 0
    %107 = vmatpush1.bf16.msra.mxu0 %v90
    %108 = vmatprep.subr.bf16.mxu0 0
    %109 = vmatpush1.bf16.msra.mxu0 %v91
    %110 = vmatprep.subr.bf16.mxu0 0
    %111 = vmatpush1.bf16.msra.mxu0 %v92
    %112 = vmatprep.subr.bf16.mxu0 0
    %113 = vmatpush1.bf16.msra.mxu0 %v93
    %114 = vmatprep.subr.bf16.mxu0 0
    %115 = vmatpush1.bf16.msra.mxu0 %v94
    %116 = vmatprep.subr.bf16.mxu0 0
    %117 = vmatpush1.bf16.msra.mxu0 %v95
    %118 = vmatprep.subr.bf16.mxu0 0
    %119 = vmatpush1.bf16.msra.mxu0 %v96
    %120 = vmatprep.subr.bf16.mxu0 0
    %121 = vmatpush1.bf16.msra.mxu0 %v97
    %122 = vmatprep.subr.bf16.mxu0 0
    %123 = vmatpush1.bf16.msra.mxu0 0
    %124 = vmatprep.subr.bf16.mxu0 0
    %125 = vmatpush1.bf16.msra.mxu0 0
    %126 = vmatprep.subr.bf16.mxu0 0
    %127 = vmatpush1.bf16.msra.mxu0 0
    %128 = vmatprep.subr.bf16.mxu0 0
    %129 = vmatpush1.bf16.msra.mxu0 0
    %130 = vmatprep.subr.bf16.mxu0 0
    %131 = vmatpush1.bf16.msra.mxu0 0
    %132 = vmatprep.subr.bf16.mxu0 0
    %133 = vmatpush1.bf16.msra.mxu0 0
    %134 = vmatprep.subr.bf16.mxu0 0
    %135 = vmatpush1.bf16.msra.mxu0 0
    %136 = vmatprep.subr.bf16.mxu0 0
    %137 = vmatpush1.bf16.msra.mxu0 0
    %138 = vmatprep.mubr.bf16.mxu0 0
    %139 = vmatmul.mubr.bf16.gmra.mrb[0].mxu0 %v56
    %v140 = vpop.f32.mrb[0].mxu0
    %v141 = vadd.f32 0.0, %v140
    %v142 = vpop.f32.mrb[0].mxu0
    %v143 = vpop.f32.mrb[0].mxu0
    %v144 = vadd.f32 0.0, %v143
    %v145 = vpop.f32.mrb[0].mxu0
    %146 = vdwg.mxu0
    %v147 = vadd.f32 %v32, %v141
    %v148 = vadd.f32 %v33, %v144
    %149 = vst [vmem:[#allocation2] sm:$0xff] %v147
    %150 = vst [vmem:[#allocation2 + $0x8] sm:$0xff] %v148
    // Predicated region
    $region18: #{_forward_impl.1} parent=1 // pred_check
      %p151 = pneg %p26
    $region19: #{_forward_impl.1} parent=1 // pred_check_branch
      %153 = sbr.rel (%p151) target = $region21
    $region20: #{_forward_impl.1} parent=1 // pred_region
      %v154 = vld [vmem:[#allocation2] sm:$0xff]
      %v155 = vld [vmem:[#allocation2 + $0x8] sm:$0xff]
      %156 = vst [vmem:[%s2] sm:$0xff] %v154
      %157 = vst [vmem:[%s2 + $0x8] sm:$0xff] %v155
    $region21: #{_forward_impl.1} parent=1 // pred_fallthru
      _
    // Predicated region
    $region22: #{_forward_impl.1} parent=1 // pred_check
      _
    $region23: #{_forward_impl.1} parent=1 // pred_check_branch
      %159 = sbr.rel (0) target = $region25
    $region24: #{_forward_impl.1} parent=1 // pred_region
      _
    $region25: #{_forward_impl.1} parent=1 // pred_fallthru
      _
    // Predicated region
    $region26: #{_forward_impl.1} parent=1 // pred_check
      _
    $region27: #{_forward_impl.1} parent=1 // pred_check_branch
      %161 = sbr.rel (0) target = $region29
    $region28: #{_forward_impl.1} parent=1 // pred_region
      _
    $region29: #{_forward_impl.1} parent=1 // pred_fallthru
      _
    %162 = vsyncpa [#allocation4], 1

</llo_original>
